<compile_context>
chip_gen: v7x
topology: tpu7x:2x2x1
jax: 0.10.0
libtpu: 0.0.40
codegen_flags: <defaults>
</compile_context>

<pallas_src>
import jax
import jax.numpy as jnp
from jax.experimental import pallas as pl
from jax.experimental.pallas import tpu as pltpu


def _identity_dma_kernel(x_hbm_ref, o_hbm_ref, sem):
    # Reference forward returns x unchanged: one HBM->HBM DMA of the whole
    # tensor (runs at HBM roofline, no VMEM round trip, no pipeline bubbles).
    cp = pltpu.make_async_copy(x_hbm_ref, o_hbm_ref, sem)
    cp.start()
    cp.wait()


def random_spatial_deformation(
    x,
    scaling_bounds=0.15,
    rotation_bounds=10,
    shearing_bounds=0.02,
    translation_bounds=False,
    enable_90_rotations=False,
    nonlin_std=4.0,
    nonlin_scale=0.0625,
    inter_method="linear",
    prob_deform=1,
    *,
    return_input_directly=False,
):
    """Pallas implementation of RandomSpatialDeformation.forward.

    The given reference forward samples affine parameters but never applies
    them to x (rotation/shearing builders return identity, the non-linear and
    90-degree branches are no-ops, and the composed matrix is discarded); it
    returns `deformed_x = x`.  Output is therefore exactly the input.  All
    constructor-style kwargs are kept for API parity but do not affect the
    result, exactly as in the reference.
    """
    del (scaling_bounds, rotation_bounds, shearing_bounds, translation_bounds,
         enable_90_rotations, nonlin_std, nonlin_scale, inter_method,
         prob_deform)  # dead w.r.t. the reference forward's output

    if return_input_directly:
        # True optimum for an identity op: move zero bytes.
        return x

    return pl.pallas_call(
        _identity_dma_kernel,
        out_shape=jax.ShapeDtypeStruct(x.shape, x.dtype),
        in_specs=[pl.BlockSpec(memory_space=pl.ANY)],
        out_specs=pl.BlockSpec(memory_space=pl.ANY),
        scratch_shapes=[pltpu.SemaphoreType.DMA(())],
    )(x)


if __name__ == "__main__":
    key = jax.random.PRNGKey(0)
    # Channels-last layout, matching the module: [batch, *spatial_dims, channels]
    x = jax.random.normal(key, (2, 16, 16, 4), dtype=jnp.float32)

    y = random_spatial_deformation(x)
    y = jax.block_until_ready(y)

    # The reference forward returns x unchanged — verify exact reproduction.
    assert y.shape == x.shape and y.dtype == x.dtype
    assert bool(jnp.all(y == x))

    print("KERNEL_OK")
</pallas_src>

<mosaic_0001>
module attributes {stable_mosaic.version = 11 : i64} {
  func.func @_identity_dma_kernel(%arg0: memref<2x16x16x4xf32, #tpu.memory_space<any>>, %arg1: memref<2x16x16x4xf32, #tpu.memory_space<any>>, %arg2: memref<!tpu.dma_semaphore, #tpu.memory_space<semaphore_mem>>) attributes {dimension_semantics = [], scalar_prefetch = 0 : i64, scratch_operands = 1 : i64, tpu.core_type = #tpu.core_type<tc>} {
    tpu.enqueue_dma source(%arg0 : memref<2x16x16x4xf32, #tpu.memory_space<any>>) target(%arg1 : memref<2x16x16x4xf32, #tpu.memory_space<any>>) target_semaphore(%arg2 : memref<!tpu.dma_semaphore, #tpu.memory_space<semaphore_mem>>)
    tpu.wait_dma2 semaphore(%arg2 : memref<!tpu.dma_semaphore, #tpu.memory_space<semaphore_mem>>) src(%arg0 : memref<2x16x16x4xf32, #tpu.memory_space<any>>) dst(%arg1 : memref<2x16x16x4xf32, #tpu.memory_space<any>>)
    return
  }
}

</mosaic_0001>

<llo_original>
// kernel: tpu_custom_call.1
$region0: #{tpu_custom_call.1}
  #allocation0 [shape = 'u32[]', space=smem, size = 0x4, offset = 0x4, fixed_abs, tag = 'smem constant byte address 0x4 - core index']
  #allocation1 [shape = 'u32[144,128]{1,0:T(1,128)}', space=vmem, size = 0x12000, scoped, tag = 'internal scratch']
  #allocation2 [shape = 's32[1]{0}', space=sflag, size = 0x4, scoped, tag = 'scratch operand']
  #allocation3 [shape = 's32[]', space=sflag, size = 0x4, offset = 0, fixed_abs, tag = 'sflag constant byte address 0x0 - dummy sync flag']
  %s0 = inlined_call_operand.vmem [shape: f32[2,16,16,4], index: 0, kind: input, shape index: {}]
  %s1 = inlined_call_operand.vmem [shape: f32[2,16,16,4], index: 1, kind: output, shape index: {}]
  %s2 = sld [smem:[#allocation0]]
  $region36: #{tpu_custom_call.1} parent=0
    _
  %s4 = ssub.s32 1, %s2
  %s5 = scalar_select 0, %s4, %s2
  %p7 = scmp.lt.u32.totalorder 512, 8
  %p8 = pneg %p7
  // Predicated region
  $region2: #{tpu_custom_call.1} parent=0 // pred_check
    _
  $region3: #{tpu_custom_call.1} parent=0 // pred_check_branch
    %10 = sbr.rel (%p7) target = $region5
  $region4: #{tpu_custom_call.1} parent=0 // pred_region
    %s25 = sand.u32 512, 7
    %p26 = scmp.eq.s32.totalorder %s25, 0
    // Predicated region
    $region17: #{tpu_custom_call.1} parent=4 // pred_check
      %p27 = pneg %p26
    $region18: #{tpu_custom_call.1} parent=4 // pred_check_branch
      %29 = sbr.rel (%p27) target = $region20
    $region19: #{tpu_custom_call.1} parent=4 // pred_region
      loop: start=0, step=1, limit=1
      $region21: #{tpu_custom_call.1} parent=19 // loop_pre_header
        _
      $region22: #{tpu_custom_call.1} parent=19 // loop_header
        %s31 = sphi 0, %s35
        %p32 = scmp.ge.s32.totalorder %s31, 1
        %s36 = sphi %s0, %s0
        %s37 = sphi %s1, %s1
      $region23: #{tpu_custom_call.1} parent=19 // loop_header_branch
        %34 = sbr.rel (%p32) target = $region27
      $region24: #{tpu_custom_call.1} parent=19 // loop_body
        %v38 = vld [vmem:[%s36] sm:$0xff]
        %39 = vst [vmem:[%s37] sm:$0xff] %v38
        %v40 = vld [vmem:[%s36 + $0x8] sm:$0xff]
        %41 = vst [vmem:[%s37 + $0x8] sm:$0xff] %v40
        %v42 = vld [vmem:[%s36 + $0x10] sm:$0xff]
        %43 = vst [vmem:[%s37 + $0x10] sm:$0xff] %v42
        %v44 = vld [vmem:[%s36 + $0x18] sm:$0xff]
        %45 = vst [vmem:[%s37 + $0x18] sm:$0xff] %v44
        %v46 = vld [vmem:[%s36 + $0x20] sm:$0xff]
        %47 = vst [vmem:[%s37 + $0x20] sm:$0xff] %v46
        %v48 = vld [vmem:[%s36 + $0x28] sm:$0xff]
        %49 = vst [vmem:[%s37 + $0x28] sm:$0xff] %v48
        %v50 = vld [vmem:[%s36 + $0x30] sm:$0xff]
        %51 = vst [vmem:[%s37 + $0x30] sm:$0xff] %v50
        %v52 = vld [vmem:[%s36 + $0x38] sm:$0xff]
        %53 = vst [vmem:[%s37 + $0x38] sm:$0xff] %v52
        %v54 = vld [vmem:[%s36 + $0x40] sm:$0xff]
        %55 = vst [vmem:[%s37 + $0x40] sm:$0xff] %v54
        %v56 = vld [vmem:[%s36 + $0x48] sm:$0xff]
        %57 = vst [vmem:[%s37 + $0x48] sm:$0xff] %v56
        %v58 = vld [vmem:[%s36 + $0x50] sm:$0xff]
        %59 = vst [vmem:[%s37 + $0x50] sm:$0xff] %v58
        %v60 = vld [vmem:[%s36 + $0x58] sm:$0xff]
        %61 = vst [vmem:[%s37 + $0x58] sm:$0xff] %v60
        %v62 = vld [vmem:[%s36 + $0x60] sm:$0xff]
        %63 = vst [vmem:[%s37 + $0x60] sm:$0xff] %v62
        %v64 = vld [vmem:[%s36 + $0x68] sm:$0xff]
        %65 = vst [vmem:[%s37 + $0x68] sm:$0xff] %v64
        %v66 = vld [vmem:[%s36 + $0x70] sm:$0xff]
        %67 = vst [vmem:[%s37 + $0x70] sm:$0xff] %v66
        %v68 = vld [vmem:[%s36 + $0x78] sm:$0xff]
        %69 = vst [vmem:[%s37 + $0x78] sm:$0xff] %v68
        %v70 = vld [vmem:[%s36 + $0x80] sm:$0xff]
        %71 = vst [vmem:[%s37 + $0x80] sm:$0xff] %v70
        %v72 = vld [vmem:[%s36 + $0x88] sm:$0xff]
        %73 = vst [vmem:[%s37 + $0x88] sm:$0xff] %v72
        %v74 = vld [vmem:[%s36 + $0x90] sm:$0xff]
        %75 = vst [vmem:[%s37 + $0x90] sm:$0xff] %v74
        %v76 = vld [vmem:[%s36 + $0x98] sm:$0xff]
        %77 = vst [vmem:[%s37 + $0x98] sm:$0xff] %v76
        %v78 = vld [vmem:[%s36 + $0xa0] sm:$0xff]
        %79 = vst [vmem:[%s37 + $0xa0] sm:$0xff] %v78
        %v80 = vld [vmem:[%s36 + $0xa8] sm:$0xff]
        %81 = vst [vmem:[%s37 + $0xa8] sm:$0xff] %v80
        %v82 = vld [vmem:[%s36 + $0xb0] sm:$0xff]
        %83 = vst [vmem:[%s37 + $0xb0] sm:$0xff] %v82
        %v84 = vld [vmem:[%s36 + $0xb8] sm:$0xff]
        %85 = vst [vmem:[%s37 + $0xb8] sm:$0xff] %v84
        %v86 = vld [vmem:[%s36 + $0xc0] sm:$0xff]
        %87 = vst [vmem:[%s37 + $0xc0] sm:$0xff] %v86
        %v88 = vld [vmem:[%s36 + $0xc8] sm:$0xff]
        %89 = vst [vmem:[%s37 + $0xc8] sm:$0xff] %v88
        %v90 = vld [vmem:[%s36 + $0xd0] sm:$0xff]
        %91 = vst [vmem:[%s37 + $0xd0] sm:$0xff] %v90
        %v92 = vld [vmem:[%s36 + $0xd8] sm:$0xff]
        %93 = vst [vmem:[%s37 + $0xd8] sm:$0xff] %v92
        %v94 = vld [vmem:[%s36 + $0xe0] sm:$0xff]
        %95 = vst [vmem:[%s37 + $0xe0] sm:$0xff] %v94
        %v96 = vld [vmem:[%s36 + $0xe8] sm:$0xff]
        %97 = vst [vmem:[%s37 + $0xe8] sm:$0xff] %v96
        %v98 = vld [vmem:[%s36 + $0xf0] sm:$0xff]
        %99 = vst [vmem:[%s37 + $0xf0] sm:$0xff] %v98
        %v100 = vld [vmem:[%s36 + $0xf8] sm:$0xff]
        %101 = vst [vmem:[%s37 + $0xf8] sm:$0xff] %v100
        %v102 = vld [vmem:[%s36 + $0x100] sm:$0xff]
        %103 = vst [vmem:[%s37 + $0x100] sm:$0xff] %v102
        %v104 = vld [vmem:[%s36 + $0x108] sm:$0xff]
        %105 = vst [vmem:[%s37 + $0x108] sm:$0xff] %v104
        %v106 = vld [vmem:[%s36 + $0x110] sm:$0xff]
        %107 = vst [vmem:[%s37 + $0x110] sm:$0xff] %v106
        %v108 = vld [vmem:[%s36 + $0x118] sm:$0xff]
        %109 = vst [vmem:[%s37 + $0x118] sm:$0xff] %v108
        %v110 = vld [vmem:[%s36 + $0x120] sm:$0xff]
        %111 = vst [vmem:[%s37 + $0x120] sm:$0xff] %v110
        %v112 = vld [vmem:[%s36 + $0x128] sm:$0xff]
        %113 = vst [vmem:[%s37 + $0x128] sm:$0xff] %v112
        %v114 = vld [vmem:[%s36 + $0x130] sm:$0xff]
        %115 = vst [vmem:[%s37 + $0x130] sm:$0xff] %v114
        %v116 = vld [vmem:[%s36 + $0x138] sm:$0xff]
        %117 = vst [vmem:[%s37 + $0x138] sm:$0xff] %v116
        %v118 = vld [vmem:[%s36 + $0x140] sm:$0xff]
        %119 = vst [vmem:[%s37 + $0x140] sm:$0xff] %v118
        %v120 = vld [vmem:[%s36 + $0x148] sm:$0xff]
        %121 = vst [vmem:[%s37 + $0x148] sm:$0xff] %v120
        %v122 = vld [vmem:[%s36 + $0x150] sm:$0xff]
        %123 = vst [vmem:[%s37 + $0x150] sm:$0xff] %v122
        %v124 = vld [vmem:[%s36 + $0x158] sm:$0xff]
        %125 = vst [vmem:[%s37 + $0x158] sm:$0xff] %v124
        %v126 = vld [vmem:[%s36 + $0x160] sm:$0xff]
        %127 = vst [vmem:[%s37 + $0x160] sm:$0xff] %v126
        %v128 = vld [vmem:[%s36 + $0x168] sm:$0xff]
        %129 = vst [vmem:[%s37 + $0x168] sm:$0xff] %v128
        %v130 = vld [vmem:[%s36 + $0x170] sm:$0xff]
        %131 = vst [vmem:[%s37 + $0x170] sm:$0xff] %v130
        %v132 = vld [vmem:[%s36 + $0x178] sm:$0xff]
        %133 = vst [vmem:[%s37 + $0x178] sm:$0xff] %v132
        %v134 = vld [vmem:[%s36 + $0x180] sm:$0xff]
        %135 = vst [vmem:[%s37 + $0x180] sm:$0xff] %v134
        %v136 = vld [vmem:[%s36 + $0x188] sm:$0xff]
        %137 = vst [vmem:[%s37 + $0x188] sm:$0xff] %v136
        %v138 = vld [vmem:[%s36 + $0x190] sm:$0xff]
        %139 = vst [vmem:[%s37 + $0x190] sm:$0xff] %v138
        %v140 = vld [vmem:[%s36 + $0x198] sm:$0xff]
        %141 = vst [vmem:[%s37 + $0x198] sm:$0xff] %v140
        %v142 = vld [vmem:[%s36 + $0x1a0] sm:$0xff]
        %143 = vst [vmem:[%s37 + $0x1a0] sm:$0xff] %v142
        %v144 = vld [vmem:[%s36 + $0x1a8] sm:$0xff]
        %145 = vst [vmem:[%s37 + $0x1a8] sm:$0xff] %v144
        %v146 = vld [vmem:[%s36 + $0x1b0] sm:$0xff]
        %147 = vst [vmem:[%s37 + $0x1b0] sm:$0xff] %v146
        %v148 = vld [vmem:[%s36 + $0x1b8] sm:$0xff]
        %149 = vst [vmem:[%s37 + $0x1b8] sm:$0xff] %v148
        %v150 = vld [vmem:[%s36 + $0x1c0] sm:$0xff]
        %151 = vst [vmem:[%s37 + $0x1c0] sm:$0xff] %v150
        %v152 = vld [vmem:[%s36 + $0x1c8] sm:$0xff]
        %153 = vst [vmem:[%s37 + $0x1c8] sm:$0xff] %v152
        %v154 = vld [vmem:[%s36 + $0x1d0] sm:$0xff]
        %155 = vst [vmem:[%s37 + $0x1d0] sm:$0xff] %v154
        %v156 = vld [vmem:[%s36 + $0x1d8] sm:$0xff]
        %157 = vst [vmem:[%s37 + $0x1d8] sm:$0xff] %v156
        %v158 = vld [vmem:[%s36 + $0x1e0] sm:$0xff]
        %159 = vst [vmem:[%s37 + $0x1e0] sm:$0xff] %v158
        %v160 = vld [vmem:[%s36 + $0x1e8] sm:$0xff]
        %161 = vst [vmem:[%s37 + $0x1e8] sm:$0xff] %v160
        %v162 = vld [vmem:[%s36 + $0x1f0] sm:$0xff]
        %163 = vst [vmem:[%s37 + $0x1f0] sm:$0xff] %v162
        %v164 = vld [vmem:[%s36 + $0x1f8] sm:$0xff]
        %165 = vst [vmem:[%s37 + $0x1f8] sm:$0xff] %v164
      $region25: #{tpu_custom_call.1} parent=19 // loop_footer
        %s35 = sadd.s32 1, %s31
      $region26: #{tpu_custom_call.1} parent=19 // loop_footer_branch
        %30 = sbr.rel target = $region22
      $region27: #{tpu_custom_call.1} parent=19 // loop_exit
        _
    $region20: #{tpu_custom_call.1} parent=4 // pred_fallthru
      _
    %p166 = pneg %p26
    // Predicated region
    $region28: #{tpu_custom_call.1} parent=4 // pred_check
      _
    $region29: #{tpu_custom_call.1} parent=4 // pred_check_branch
      %168 = sbr.rel (%p26) target = $region31
    $region30: #{tpu_custom_call.1} parent=4 // pred_region
      %s169 = sand.u32 512, 7
    $region31: #{tpu_custom_call.1} parent=4 // pred_fallthru
      _
  $region5: #{tpu_custom_call.1} parent=0 // pred_fallthru
    _
  // Predicated region
  $region6: #{tpu_custom_call.1} parent=0 // pred_check
    %p11 = pneg %p7
  $region7: #{tpu_custom_call.1} parent=0 // pred_check_branch
    %13 = sbr.rel (%p11) target = $region9
  $region8: #{tpu_custom_call.1} parent=0 // pred_region
    %s14 = sshllo.u32 0, 512
    loop: start=0, step=1, limit=1
    $region10: #{tpu_custom_call.1} parent=8 // loop_pre_header
      _
    $region11: #{tpu_custom_call.1} parent=8 // loop_header
      %s16 = sphi 0, %s20
      %p17 = scmp.ge.s32.totalorder %s16, 1
      %s21 = sphi %s0, %s0
      %s22 = sphi %s1, %s1
    $region12: #{tpu_custom_call.1} parent=8 // loop_header_branch
      %19 = sbr.rel (%p17) target = $region16
    $region13: #{tpu_custom_call.1} parent=8 // loop_body
      %v23 = vld [vmem:[%s21] sm:%s14]
      %24 = vst [vmem:[%s22] sm:%s14] %v23
    $region14: #{tpu_custom_call.1} parent=8 // loop_footer
      %s20 = sadd.s32 1, %s16
    $region15: #{tpu_custom_call.1} parent=8 // loop_footer_branch
      %15 = sbr.rel target = $region11
    $region16: #{tpu_custom_call.1} parent=8 // loop_exit
      _
  $region9: #{tpu_custom_call.1} parent=0 // pred_fallthru
    _
  // Predicated region
  $region32: #{tpu_custom_call.1} parent=0 // pred_check
    _
  $region33: #{tpu_custom_call.1} parent=0 // pred_check_branch
    %172 = sbr.rel (0) target = $region35
  $region34: #{tpu_custom_call.1} parent=0 // pred_region
    %173 = vsyncadd [#allocation2], 8192
  $region35: #{tpu_custom_call.1} parent=0 // pred_fallthru
    _
  %s174 = smul.u32 2, 16
  %s175 = smul.u32 %s174, 16
  %s176 = smul.u32 %s175, 1
  %s177 = sshll.u32 %s176, 4
  %178 = dma.done [#allocation2], %s177
  %179 = vsyncmov [#allocation2]
  %s180 = vpop.sfrf %179
  %p181 = scmp.eq.s32.totalorder %s180, 0
  %p182 = pneg %p181
  %184 = shalt.err (%p182)

</llo_original>
